<compile_context>
chip_gen: v7x
topology: tpu7x:2x2x1
jax: 0.10.0
libtpu: 0.0.40
codegen_flags: <defaults>
</compile_context>

<pallas_src>
import functools

import jax
import jax.numpy as jnp
from jax import lax, random
from jax.experimental import pallas as pl
from jax.experimental.pallas import tpu as pltpu


# -------------------- roll-direction probe (run once, cached) --------------------
@functools.lru_cache(maxsize=None)
def _roll_shift_sign() -> int:
    """We need shifted[l] = x[l + s]. pltpu.roll is expected to match jnp.roll
    (out[l] = x[l - shift]); verify once on-device so the main kernel is
    correct under either convention."""
    def probe(x_ref, o_ref):
        o_ref[...] = pltpu.roll(x_ref[...], 1, 1)

    x = jnp.tile(jnp.arange(128, dtype=jnp.float32)[None, :], (8, 1))
    y = pl.pallas_call(probe, out_shape=jax.ShapeDtypeStruct((8, 128), jnp.float32))(x)
    matches_jnp = bool(jax.device_get(y)[0, 1] == 0.0)  # jnp.roll: y[0,1] == x[0,0] == 0
    return -1 if matches_jnp else 1


# -------------------- fused CIB kernel (built per static shape) --------------------
def _make_cib_kernel(H, W, add, roll_sign):
    HW = H * W

    def dw_silu(x, w9, b, masks):
        # x: (C, HW) f32, w9: (9, C, 1) scale-folded taps, b: (C, 1), masks: (9, 1, HW)
        acc = jnp.zeros(x.shape, jnp.float32)
        for k in range(9):
            dy, dx = divmod(k, 3)
            s = (dy - 1) * W + (dx - 1)                     # flat neighbor offset
            shifted = x if s == 0 else pltpu.roll(x, (roll_sign * s) % HW, 1)
            acc = acc + shifted * masks[k] * w9[k]          # mask kills wrapped/OOB taps
        y = acc + b
        return y * jax.nn.sigmoid(y)

    def pw_silu(x, wt, b):
        # x: (Cin, HW), wt: (Cout, Cin) scale-folded, b: (Cout, 1)
        y = jnp.dot(wt, x, preferred_element_type=jnp.float32)
        y = y + b
        return y * jax.nn.sigmoid(y)

    def kernel(m_ref, x_ref,
               w1_ref, b1_ref, w2_ref, b2_ref, w3_ref, b3_ref,
               w4_ref, b4_ref, w5_ref, b5_ref, o_ref):
        masks = m_ref[...]                                   # (9, 1, HW)
        x0 = x_ref[0].astype(jnp.float32)                    # (C1, HW)
        y = dw_silu(x0, w1_ref[...], b1_ref[...], masks)     # (C1, HW)
        y = pw_silu(y, w2_ref[...], b2_ref[...])             # (Cm, HW)
        y = dw_silu(y, w3_ref[...], b3_ref[...], masks)      # (Cm, HW)
        y = pw_silu(y, w4_ref[...], b4_ref[...])             # (C2, HW)
        y = dw_silu(y, w5_ref[...], b5_ref[...], masks)      # (C2, HW)
        if add:
            y = y + x0                                       # fused residual
        o_ref[0] = y.astype(o_ref.dtype)

    return kernel


# -------------------- parameter prep (BN scale folded into weights) --------------------
def _prep_dw(w, scale, shift):
    # w: (3,3,C), scale/shift: (C,)  ->  (9, C, 1) folded taps, (C, 1) shift
    C = w.shape[-1]
    wf = (w * scale).reshape(9, C, 1).astype(jnp.float32)
    return wf, shift.reshape(C, 1).astype(jnp.float32)


def _prep_pw(w, scale, shift):
    # w: (Cin, Cout), scale/shift: (Cout,) -> (Cout, Cin) folded+transposed, (Cout, 1)
    Cout = w.shape[-1]
    wt = (w * scale[None, :]).T.astype(jnp.float32)
    return wt, shift.reshape(Cout, 1).astype(jnp.float32)


def _tap_masks(H, W):
    """0/1 float masks (9, 1, H*W): validity of each 3x3 tap at each output pixel."""
    HW = H * W
    flat = jnp.arange(HW)
    rows, cols = flat // W, flat % W
    ms = []
    for k in range(9):
        dy, dx = divmod(k, 3)
        oy, ox = dy - 1, dx - 1
        m = ((rows + oy >= 0) & (rows + oy < H) &
             (cols + ox >= 0) & (cols + ox < W))
        ms.append(m.astype(jnp.float32))
    return jnp.stack(ms).reshape(9, 1, HW)


# -------------------- parameter init (deterministic, synthetic) --------------------
def _bn_scale_shift(key, c, eps=1e-5):
    k1, k2, k3, k4 = random.split(key, 4)
    gamma = 1.0 + 0.1 * random.normal(k1, (c,), jnp.float32)
    beta = 0.1 * random.normal(k2, (c,), jnp.float32)
    mean = 0.1 * random.normal(k3, (c,), jnp.float32)
    var = 0.5 + jnp.abs(random.normal(k4, (c,), jnp.float32))
    scale = gamma / jnp.sqrt(var + eps)
    shift = beta - mean * scale
    return scale, shift


def init_cib_params(key, c1, c2, e=0.5):
    c_ = int(c2 * e)
    layers = [(c1, c1, "dw"), (c1, 2 * c_, "pw"), (2 * c_, 2 * c_, "dw"),
              (2 * c_, c2, "pw"), (c2, c2, "dw")]
    params = []
    for i, (cin, cout, kind) in enumerate(layers):
        kw, kb = random.split(random.fold_in(key, i))
        if kind == "dw":
            w = 0.2 * random.normal(kw, (3, 3, cout), jnp.float32)   # (kh,kw,C)
        else:
            w = 0.2 * random.normal(kw, (cin, cout), jnp.float32)    # (Cin,Cout)
        scale, shift = _bn_scale_shift(kb, cout)
        params.append((kind, w, scale, shift))
    return params


# -------------------- CIB forward (fused Pallas kernel) --------------------
def cib_forward(x_nchw, params, shortcut=True):
    N, C1, H, W = x_nchw.shape
    HW = H * W
    assert [p[0] for p in params] == ["dw", "pw", "dw", "pw", "dw"]

    w1, b1 = _prep_dw(*params[0][1:])
    w2, b2 = _prep_pw(*params[1][1:])
    w3, b3 = _prep_dw(*params[2][1:])
    w4, b4 = _prep_pw(*params[3][1:])
    w5, b5 = _prep_dw(*params[4][1:])
    C2 = params[4][1].shape[-1]
    add = bool(shortcut and (C1 == C2))

    masks = _tap_masks(H, W)
    x_flat = x_nchw.reshape(N, C1, HW)          # free reshape; stays channels-first

    kernel = _make_cib_kernel(H, W, add, _roll_shift_sign())

    def const_spec(a):
        nd = a.ndim
        return pl.BlockSpec(a.shape, lambda n, _nd=nd: (0,) * _nd)

    grid_spec = pltpu.PrefetchScalarGridSpec(
        num_scalar_prefetch=0,
        grid=(N,),
        in_specs=[
            const_spec(masks),
            pl.BlockSpec((1, C1, HW), lambda n: (n, 0, 0)),
            const_spec(w1), const_spec(b1),
            const_spec(w2), const_spec(b2),
            const_spec(w3), const_spec(b3),
            const_spec(w4), const_spec(b4),
            const_spec(w5), const_spec(b5),
        ],
        out_specs=pl.BlockSpec((1, C2, HW), lambda n: (n, 0, 0)),
    )

    out_flat = pl.pallas_call(
        kernel,
        out_shape=jax.ShapeDtypeStruct((N, C2, HW), x_nchw.dtype),
        grid_spec=grid_spec,
        compiler_params=pltpu.CompilerParams(
            dimension_semantics=("parallel",),
            vmem_limit_bytes=32 * 1024 * 1024,
        ),
    )(masks, x_flat, w1, b1, w2, b2, w3, b3, w4, b4, w5, b5)

    return out_flat.reshape(N, C2, H, W)


# -------------------- pure-JAX reference (for correctness check) --------------------
def _ref_dw(x, w, scale, shift):
    C = x.shape[-1]
    out = lax.conv_general_dilated(
        x, w.reshape(3, 3, 1, C), (1, 1), "SAME",
        dimension_numbers=("NHWC", "HWIO", "NHWC"), feature_group_count=C)
    y = out * scale + shift
    return y * jax.nn.sigmoid(y)


def _ref_pw(x, w, scale, shift):
    y = jnp.einsum("nhwc,cd->nhwd", x, w) * scale + shift
    return y * jax.nn.sigmoid(y)


def cib_ref(x_nchw, params, shortcut=True):
    x = jnp.transpose(x_nchw, (0, 2, 3, 1))
    y = x
    for kind, w, scale, shift in params:
        y = _ref_dw(y, w, scale, shift) if kind == "dw" else _ref_pw(y, w, scale, shift)
    if shortcut and x_nchw.shape[1] == y.shape[-1]:
        y = x + y
    return jnp.transpose(y, (0, 3, 1, 2))


if __name__ == "__main__":
    key = random.PRNGKey(0)
    kx, kp = random.split(key)
    N, C1, H, W = 2, 4, 16, 16
    C2 = 4  # c1 == c2 and shortcut=True -> residual add is active
    x = random.normal(kx, (N, C1, H, W), jnp.float32)
    params = init_cib_params(kp, C1, C2, e=0.5)

    out = jax.block_until_ready(cib_forward(x, params))
    ref = jax.block_until_ready(cib_ref(x, params))

    assert out.shape == (N, C2, H, W), out.shape
    if not jnp.allclose(out, ref, atol=2e-3, rtol=2e-3):
        raise SystemExit(f"mismatch: max abs err {float(jnp.max(jnp.abs(out - ref)))}")
    print("KERNEL_OK")
</pallas_src>

<mosaic_0001>
module attributes {stable_mosaic.version = 11 : i64} {
  func.func @probe(%arg0: memref<8x128xf32, #tpu.memory_space<vmem>>, %arg1: memref<8x128xf32, #tpu.memory_space<vmem>>) attributes {dimension_semantics = [], scalar_prefetch = 0 : i64, scratch_operands = 0 : i64, tpu.core_type = #tpu.core_type<tc>} {
    %c0 = arith.constant 0 : index
    %c0_0 = arith.constant 0 : index
    %0 = vector.load %arg0[%c0, %c0_0] : memref<8x128xf32, #tpu.memory_space<vmem>>, vector<8x128xf32>
    %c1_i32 = arith.constant 1 : i32
    %1 = tpu.dynamic_rotate %0 by %c1_i32 dim 1 : vector<8x128xf32>, i32 -> vector<8x128xf32>
    %c0_1 = arith.constant 0 : index
    %c0_2 = arith.constant 0 : index
    %2 = vector.load %arg1[%c0_1, %c0_2] : memref<8x128xf32, #tpu.memory_space<vmem>>, vector<8x128xf32>
    tpu.vector_store %arg1[%c0_1, %c0_2], %1 {strides = array<i32>} : memref<8x128xf32, #tpu.memory_space<vmem>>, vector<8x128xf32>,
    return
  }
}

</mosaic_0001>

<llo_original>
// kernel: tpu_custom_call.1
$region0: #{tpu_custom_call.1}
  #allocation0 [shape = 'u32[]', space=smem, size = 0x4, offset = 0x4, fixed_abs, tag = 'smem constant byte address 0x4 - core index']
  #allocation1 [shape = 'u32[144,128]{1,0:T(1,128)}', space=vmem, size = 0x12000, scoped, tag = 'internal scratch']
  %s0 = inlined_call_operand.hbm [shape: f32[8,128], index: 0, kind: input, shape index: {}]
  %s1 = inlined_call_operand.hbm [shape: f32[8,128], index: 1, kind: output, shape index: {}]
  %s2 = sld [smem:[#allocation0]]
  $region18: #{tpu_custom_call.1} parent=0
    _
  %s4 = ssub.s32 1, %s2
  %s5 = scalar_select 0, %s4, %s2
  $region1: #{tpu_custom_call.1} parent=0
    #allocation2 [shape = 'u8[4096]{0}', space=vmem, size = 0x1000, scoped, tag = 'input window, operand 0, single buffered']
    #allocation3 [shape = 's32[1]{0}', space=sflag, size = 0x4, scoped, tag = 'scoped memory for tpu_custom_call.1']
    #allocation4 [shape = 's32[1]{0}', space=sflag, size = 0x4, scoped, tag = 'scoped memory for tpu_custom_call.1']
    #allocation5 [shape = 'u8[4096]{0}', space=vmem, size = 0x1000, scoped, tag = 'output window, operand 0, single buffered']
    %6 = vsyncpa [#allocation3], 0
    %7 = vsyncpa [#allocation4], 0
    // Predicated region
    $region2: #{tpu_custom_call.1} parent=1 // pred_check
      _
    $region3: #{tpu_custom_call.1} parent=1 // pred_check_branch
      %9 = sbr.rel (0) target = $region5
    $region4: #{tpu_custom_call.1} parent=1 // pred_region
      %s11 = ssub.s32 128, 128
      %12 = vsyncadd [#allocation3], %s11
      %s14 = sshll.u32 [#allocation2], 4
      %s15 = int_to_ptr.vmem [resolvable:$true] %s14
      %17 = dma.hbm_to_vmem [thread:$0]  %s0, 128, %s15, [#allocation3]
    $region5: #{tpu_custom_call.1} parent=1 // pred_fallthru
      _
    // Predicated region
    $region6: #{tpu_custom_call.1} parent=1 // pred_check
      _
    $region7: #{tpu_custom_call.1} parent=1 // pred_check_branch
      %19 = sbr.rel (0) target = $region9
    $region8: #{tpu_custom_call.1} parent=1 // pred_region
      %20 = dma.done [#allocation3], 128
    $region9: #{tpu_custom_call.1} parent=1 // pred_fallthru
      _
    %v21 = vld [vmem:[#allocation2] sm:$0xff]
    %22 = vrot.lane.b32.xlu0 %v21, 1
    %v23 = vpop.permute.xlu0 %22
    %24 = vst [vmem:[#allocation5] sm:$0xff] %v23
    // Predicated region
    $region10: #{tpu_custom_call.1} parent=1 // pred_check
      _
    $region11: #{tpu_custom_call.1} parent=1 // pred_check_branch
      %26 = sbr.rel (0) target = $region13
    $region12: #{tpu_custom_call.1} parent=1 // pred_region
      %s28 = ssub.s32 128, 128
      %29 = vsyncadd [#allocation4], %s28
      %s31 = sshll.u32 [#allocation5], 4
      %s32 = int_to_ptr.vmem [resolvable:$true] %s31
      %34 = dma.vmem_to_hbm [thread:$0]  %s32, 128, %s1, [#allocation4]
    $region13: #{tpu_custom_call.1} parent=1 // pred_fallthru
      _
    // Predicated region
    $region14: #{tpu_custom_call.1} parent=1 // pred_check
      _
    $region15: #{tpu_custom_call.1} parent=1 // pred_check_branch
      %36 = sbr.rel (0) target = $region17
    $region16: #{tpu_custom_call.1} parent=1 // pred_region
      %37 = dma.done [#allocation4], 128
    $region17: #{tpu_custom_call.1} parent=1 // pred_fallthru
      _
    %38 = vsyncpa [#allocation3], 1
    %39 = vsyncpa [#allocation4], 1

</llo_original>
